<compile_context>
chip_gen: v5e
topology: v5e:2x2
jax: 0.10.0
libtpu: 0.0.40
codegen_flags: <defaults>
</compile_context>

<pallas_src>
import jax
import jax.numpy as jnp
from jax.experimental import pallas as pl
from jax.experimental.pallas import tpu as pltpu


def _vmem_budget():
    """Returns (per-x-block budget, requested scoped-VMEM limit) per chip gen."""
    try:
        cap = pltpu.get_tpu_info().vmem_capacity_bytes
    except Exception:
        cap = 64 * 1024 * 1024          # conservative default (v7x-sized)
    if cap >= 100 * 1024 * 1024:        # v5e / v6e: 128 MiB physical VMEM
        return 14 * 1024 * 1024, 56 * 1024 * 1024
    # v7x: 64 MiB per TensorCore -- ~10 MiB blocks (2x buffered ~20 MiB) + headroom
    return 10 * 1024 * 1024, 40 * 1024 * 1024


def _choose_tile_rows(n_rows, k, itemsize, block_budget_bytes):
    """Largest row tile whose (tile_rows, K) x block fits the budget, rounded to
    the dtype's sublane pack (f32: 8, bf16: 16, int8: 32)."""
    sub = max(8, 32 // max(1, itemsize))
    max_rows = max(sub, block_budget_bytes // max(1, k * itemsize))
    if n_rows <= max_rows:
        # Single full-extent block: "block dim == full array dim" always satisfies
        # the (8, 128) tiling rule, even for tiny / unaligned n_rows.
        return n_rows
    return max(sub, (max_rows // sub) * sub)


def _simple_linear_classifier_kernel(x_ref, w_ref, b_ref, mask_ref, o_ref):
    # x_ref:    (tile_rows, K)  row tile of the (possibly lane-packed) sentence
    #                           vectors, native dtype (f32 / bf16 -> MXU directly).
    # w_ref:    (K, C)          VMEM-resident weight (C=1, or C=reps block-diagonal
    #                           packed weight for the small-H lane-packed path).
    # b_ref:    (1,)            bias scalar in SMEM (f32).
    # mask_ref: (tile_rows, C)  f32 mask tile in the output layout.
    # o_ref:    (tile_rows, C)  sent_scores tile (f32).
    # H-reduction on the MXU with f32 accumulation; no full-tile cast of x.
    scores = jnp.dot(x_ref[...], w_ref[...],
                     preferred_element_type=jnp.float32) + b_ref[0]
    scores = scores * mask_ref[...]                # sent_scores = scores * mask.float()
    # sent_scores[sent_scores == 0] = -9000.0   (exact-equality semantics preserved)
    o_ref[...] = jnp.where(scores == 0.0, jnp.float32(-9000.0), scores)


def simple_linear_classifier(x, mask, weight, bias):
    """x: (B, S, H) float (f32/bf16); mask: (B, S) bool/int/float;
    weight: (1, H); bias: (1,). Returns sent_scores: (B, S) float32."""
    B, S, H = x.shape
    N = B * S
    w_flat = weight.reshape(H).astype(x.dtype)     # tiny; keeps the MXU dot in x's dtype

    # Lane packing for small H: fold reps = 128//H sentences per row so the
    # 128-lane vregs / MXU are fully used instead of 25%-filled (e.g. H=32).
    if H < 128 and 128 % H == 0 and (N * H) % 128 == 0:
        reps = 128 // H
        K, C = 128, reps
        x2 = x.reshape(N // reps, K)               # free row-major view of x
        eye = jnp.eye(reps, dtype=x.dtype)
        # Column c holds w in lanes c*H:(c+1)*H -> dot picks sentence r*reps + c.
        W = jnp.einsum("h,rc->rhc", w_flat, eye).reshape(K, C)
    else:
        K, C = H, 1
        x2 = x.reshape(N, K)                       # free view, native dtype
        W = w_flat.reshape(K, C)

    n_rows = x2.shape[0]
    block_budget, vmem_limit = _vmem_budget()
    tile_rows = _choose_tile_rows(n_rows, K, x.dtype.itemsize, block_budget)
    grid = pl.cdiv(n_rows, tile_rows)
    tile_n = tile_rows * C                         # sentence scores per grid step
    n_pad = grid * tile_n                          # sentences incl. ragged-tile padding

    # Only the tiny mask is cast / padded; x is never copied, cast or padded (the
    # ragged last x block is handled by Pallas OOB padding; those rows get mask=0
    # and are sliced off below).
    mask_flat = mask.reshape(N).astype(jnp.float32)
    if n_pad != N:
        mask_flat = jnp.pad(mask_flat, (0, n_pad - N))
    mask2 = mask_flat.reshape(grid * tile_rows, C)

    b1 = bias.reshape(1).astype(jnp.float32)       # SMEM scalar

    cost = pl.CostEstimate(
        flops=2 * n_rows * K * C,
        transcendentals=0,
        bytes_accessed=(x2.size * x2.dtype.itemsize
                        + mask2.size * 4
                        + W.size * W.dtype.itemsize
                        + n_pad * 4),
    )

    out = pl.pallas_call(
        _simple_linear_classifier_kernel,
        out_shape=jax.ShapeDtypeStruct((grid * tile_rows, C), jnp.float32),
        grid=(grid,),
        in_specs=[
            pl.BlockSpec((tile_rows, K), lambda i: (i, 0)),        # x: pipelined row tiles
            pl.BlockSpec((K, C), lambda i: (0, 0)),                # weight: VMEM-resident
            pl.BlockSpec(memory_space=pltpu.MemorySpace.SMEM),     # bias: SMEM scalar
            pl.BlockSpec((tile_rows, C), lambda i: (i, 0)),        # mask: output layout
        ],
        out_specs=pl.BlockSpec((tile_rows, C), lambda i: (i, 0)),
        compiler_params=pltpu.CompilerParams(
            # Megacore sharding of the row-tile axis; on v7x verify both TCs run
            # (else switch to pltpu.CORE_PARALLEL on this axis).
            dimension_semantics=("parallel",),
            vmem_limit_bytes=vmem_limit,
        ),
        cost_estimate=cost,
    )(x2, W, b1, mask2)

    out_flat = out.reshape(n_pad)
    if n_pad != N:
        out_flat = out_flat[:N]   # drop padded sentences (may hold garbage/NaN) -- keep!
    return out_flat.reshape(B, S)


if __name__ == "__main__":
    key = jax.random.PRNGKey(0)
    k_x, k_w, k_b, k_m = jax.random.split(key, 4)

    batch, seq, hidden = 2, 8, 32   # web_hidden_size = 32

    x = jax.random.normal(k_x, (batch, seq, hidden), dtype=jnp.float32)
    # mask: True for real sentences, False for padding (native bool; cast in wrapper)
    mask = jax.random.uniform(k_m, (batch, seq)) > 0.3

    # Deterministic nn.Linear(hidden, 1)-style parameters (PyTorch-default uniform)
    bound = 1.0 / (hidden ** 0.5)
    weight = jax.random.uniform(k_w, (1, hidden), minval=-bound, maxval=bound,
                                dtype=jnp.float32)
    bias = jax.random.uniform(k_b, (1,), minval=-bound, maxval=bound,
                              dtype=jnp.float32)

    sent_scores = simple_linear_classifier(x, mask, weight, bias)
    sent_scores = jax.block_until_ready(sent_scores)

    # Pure-JAX reference (elementwise f32 reduce -- no XLA matmul precision quirks)
    mask_f = mask.astype(jnp.float32)
    ref = jnp.sum(x * weight.reshape(1, 1, hidden), axis=-1) + bias[0]
    ref = ref * mask_f
    ref = jnp.where(ref == 0.0, -9000.0, ref)
    assert sent_scores.shape == (batch, seq)
    assert jnp.allclose(sent_scores, ref, atol=1e-3, rtol=1e-3), "mismatch vs reference"

    print("KERNEL_OK")
</pallas_src>

<mosaic_0001>
module attributes {stable_mosaic.version = 11 : i64} {
  func.func @_simple_linear_classifier_kernel(%arg0: i32, %arg1: memref<4x128xf32, #tpu.memory_space<vmem>>, %arg2: memref<128x4xf32, #tpu.memory_space<vmem>>, %arg3: memref<1xf32, #tpu.memory_space<smem>>, %arg4: memref<4x4xf32, #tpu.memory_space<vmem>>, %arg5: memref<4x4xf32, #tpu.memory_space<vmem>>) attributes {dimension_semantics = [#tpu.dimension_semantics<parallel>], iteration_bounds = array<i64: 1>, scalar_prefetch = 0 : i64, scratch_operands = 0 : i64, tpu.core_type = #tpu.core_type<tc>, window_params = [{transform_indices = @transform_0, window_bounds = array<i64: 4, 128>}, {pipeline_mode = #tpu.pipeline_mode<synchronous>, transform_indices = @transform_1, window_bounds = array<i64: 128, 4>}, {transform_indices = @transform_2, window_bounds = array<i64: 1>}, {transform_indices = @transform_3, window_bounds = array<i64: 4, 4>}, {transform_indices = @transform_4, window_bounds = array<i64: 4, 4>}]} {
    %c0 = arith.constant 0 : index
    %c0_0 = arith.constant 0 : index
    %0 = vector.load %arg1[%c0, %c0_0] : memref<4x128xf32, #tpu.memory_space<vmem>>, vector<4x128xf32>
    %c0_1 = arith.constant 0 : index
    %c0_2 = arith.constant 0 : index
    %1 = vector.load %arg2[%c0_1, %c0_2] : memref<128x4xf32, #tpu.memory_space<vmem>>, vector<128x4xf32>
    %cst = arith.constant dense<0.000000e+00> : vector<4x4xf32>
    %2 = tpu.matmul %0, %1, %cst {dimension_numbers = #tpu.dot_dimension_numbers<[1], [0], [0], [1], [0, 0, 1, 1], [], []>} : vector<4x128xf32>, vector<128x4xf32>, vector<4x4xf32> -> vector<4x4xf32>
    %c0_3 = arith.constant 0 : index
    %3 = memref.load %arg3[%c0_3] : memref<1xf32, #tpu.memory_space<smem>>
    %4 = vector.broadcast %3 : f32 to vector<4x4xf32>
    %5 = arith.addf %2, %4 : vector<4x4xf32>
    %c0_4 = arith.constant 0 : index
    %c0_5 = arith.constant 0 : index
    %6 = vector.load %arg4[%c0_4, %c0_5] : memref<4x4xf32, #tpu.memory_space<vmem>>, vector<4x4xf32>
    %7 = arith.mulf %5, %6 : vector<4x4xf32>
    %cst_6 = arith.constant 0.000000e+00 : f32
    %8 = vector.broadcast %cst_6 : f32 to vector<4x4xf32>
    %9 = arith.cmpf oeq, %7, %8 : vector<4x4xf32>
    %cst_7 = arith.constant -9.000000e+03 : f32
    %10 = vector.broadcast %cst_7 : f32 to vector<4x4xf32>
    %11 = arith.select %9, %10, %7 : vector<4x4xi1>, vector<4x4xf32>
    %c0_8 = arith.constant 0 : index
    %c0_9 = arith.constant 0 : index
    %12 = vector.load %arg5[%c0_8, %c0_9] : memref<4x4xf32, #tpu.memory_space<vmem>>, vector<4x4xf32>
    tpu.vector_store %arg5[%c0_8, %c0_9], %11 {strides = array<i32>} : memref<4x4xf32, #tpu.memory_space<vmem>>, vector<4x4xf32>,
    return
  }
  func.func @transform_0(%arg0: i32) -> (i32, i32) {
    %c0_i32 = arith.constant 0 : i32
    %c0_i32_0 = arith.constant 0 : i32
    return %arg0, %c0_i32 : i32, i32
  }
  func.func @transform_1(%arg0: i32) -> (i32, i32) {
    %c0_i32 = arith.constant 0 : i32
    %c0_i32_0 = arith.constant 0 : i32
    %c0_i32_1 = arith.constant 0 : i32
    return %c0_i32, %c0_i32_0 : i32, i32
  }
  func.func @transform_2(%arg0: i32) -> i32 {
    %c0_i32 = arith.constant 0 : i32
    %c0_i32_0 = arith.constant 0 : i32
    return %c0_i32 : i32
  }
  func.func @transform_3(%arg0: i32) -> (i32, i32) {
    %c0_i32 = arith.constant 0 : i32
    %c0_i32_0 = arith.constant 0 : i32
    return %arg0, %c0_i32 : i32, i32
  }
  func.func @transform_4(%arg0: i32) -> (i32, i32) {
    %c0_i32 = arith.constant 0 : i32
    %c0_i32_0 = arith.constant 0 : i32
    return %arg0, %c0_i32 : i32, i32
  }
}

</mosaic_0001>

<llo_original>
// kernel: tpu_custom_call.1
$region0: #{tpu_custom_call.1}
  #allocation0 [shape = 'u32[]', space=smem, size = 0x4, offset = 0x4, fixed_abs, tag = 'smem constant byte address 0x4 - core index']
  #allocation1 [shape = 'u32[72,128]{1,0:T(1,128)}', space=vmem, size = 0x9000, scoped, tag = 'internal scratch']
  #allocation2 [shape = 'f32[1]{0:T(128)S(6)}', space=smem, size = 0x200, scoped, tag = 'scoped memory for tpu_custom_call.1']
  %s0 = inlined_call_operand.vmem [shape: f32[4,128], index: 0, kind: input, shape index: {}]
  %s1 = inlined_call_operand.vmem [shape: f32[128,4], index: 1, kind: input, shape index: {}]
  %s2 = inlined_call_operand.<no memory space> [shape: f32[1], index: 2, kind: input, shape index: {}]
  %s3 = inlined_call_operand.vmem [shape: f32[4,4], index: 3, kind: input, shape index: {}]
  %s4 = inlined_call_operand.hbm [shape: f32[4,4], index: 4, kind: output, shape index: {}]
  %s5 = sld [smem:[#allocation0]]
  $region26: #{tpu_custom_call.1} parent=0
    _
  %s7 = ssub.s32 1, %s5
  %s8 = scalar_select 0, %s7, %s5
  %9 = sst [smem:[#allocation2]] %s2
  $region1: #{tpu_custom_call.1} parent=0
    #allocation3 [shape = 'u8[2048]{0}', space=vmem, size = 0x800, scoped, tag = 'output window, operand 0, single buffered']
    #allocation4 [shape = 's32[1]{0}', space=sflag, size = 0x4, scoped, tag = 'scoped memory for tpu_custom_call.1']
    %10 = vsyncpa [#allocation4], 0
    // Predicated region
    $region2: #{tpu_custom_call.1} parent=1 // pred_check
      _
    $region3: #{tpu_custom_call.1} parent=1 // pred_check_branch
      %12 = sbr.rel (0) target = $region5
    $region4: #{tpu_custom_call.1} parent=1 // pred_region
      _
    $region5: #{tpu_custom_call.1} parent=1 // pred_fallthru
      _
    // Predicated region
    $region6: #{tpu_custom_call.1} parent=1 // pred_check
      _
    $region7: #{tpu_custom_call.1} parent=1 // pred_check_branch
      %14 = sbr.rel (0) target = $region9
    $region8: #{tpu_custom_call.1} parent=1 // pred_region
      _
    $region9: #{tpu_custom_call.1} parent=1 // pred_fallthru
      _
    // Predicated region
    $region10: #{tpu_custom_call.1} parent=1 // pred_check
      _
    $region11: #{tpu_custom_call.1} parent=1 // pred_check_branch
      %16 = sbr.rel (0) target = $region13
    $region12: #{tpu_custom_call.1} parent=1 // pred_region
      _
    $region13: #{tpu_custom_call.1} parent=1 // pred_fallthru
      _
    // Predicated region
    $region14: #{tpu_custom_call.1} parent=1 // pred_check
      _
    $region15: #{tpu_custom_call.1} parent=1 // pred_check_branch
      %18 = sbr.rel (0) target = $region17
    $region16: #{tpu_custom_call.1} parent=1 // pred_region
      _
    $region17: #{tpu_custom_call.1} parent=1 // pred_fallthru
      _
    %v19 = vld [vmem:[%s0] sm:$0xf]
    %v20 = vld [vmem:[%s1] sm:$0xff]
    %v21 = vld [vmem:[%s1 + $0x8] sm:$0xff]
    %v22 = vld [vmem:[%s1 + $0x10] sm:$0xff]
    %v23 = vld [vmem:[%s1 + $0x18] sm:$0xff]
    %v24 = vld [vmem:[%s1 + $0x20] sm:$0xff]
    %v25 = vld [vmem:[%s1 + $0x28] sm:$0xff]
    %v26 = vld [vmem:[%s1 + $0x30] sm:$0xff]
    %v27 = vld [vmem:[%s1 + $0x38] sm:$0xff]
    %v28 = vld [vmem:[%s1 + $0x40] sm:$0xff]
    %v29 = vld [vmem:[%s1 + $0x48] sm:$0xff]
    %v30 = vld [vmem:[%s1 + $0x50] sm:$0xff]
    %v31 = vld [vmem:[%s1 + $0x58] sm:$0xff]
    %v32 = vld [vmem:[%s1 + $0x60] sm:$0xff]
    %v33 = vld [vmem:[%s1 + $0x68] sm:$0xff]
    %v34 = vld [vmem:[%s1 + $0x70] sm:$0xff]
    %v35 = vld [vmem:[%s1 + $0x78] sm:$0xff]
    %s36 = sld [smem:[#allocation2]]
    %v37 = vstv %s36
    %38 = vmatpush.msra.mxu0 %v35
    %39 = vmatpush.msra.mxu0 %v34
    %40 = vmatpush.msra.mxu0 %v33
    %41 = vmatpush.msra.mxu0 %v32
    %42 = vmatpush.msra.mxu0 %v31
    %43 = vmatpush.msra.mxu0 %v30
    %44 = vmatpush.msra.mxu0 %v29
    %45 = vmatpush.msra.mxu0 %v28
    %46 = vmatpush.msra.mxu0 %v27
    %47 = vmatpush.msra.mxu0 %v26
    %48 = vmatpush.msra.mxu0 %v25
    %49 = vmatpush.msra.mxu0 %v24
    %50 = vmatpush.msra.mxu0 %v23
    %51 = vmatpush.msra.mxu0 %v22
    %52 = vmatpush.msra.mxu0 %v21
    %53 = vmatpush.msra.mxu0 %v20
    %54 = vmatmul.f32.gmra.mxu0 %v19
    %v55 = vpop.f32.mrf.mxu0
    %v56 = vadd.f32 %v37, %v55
    %57 = vdwg.mxu0
    %v58 = vld [vmem:[%s3] sm:$0xf]
    %v59 = vmul.f32 %v56, %v58
    %vm60 = vcmp.eq.f32.partialorder %v59, 0.0
    %v61 = vsel %vm60, -9000.0, %v59
    %vm62 = vcmask 27648
    %63 = vst.msk [vmem:[#allocation3] sm:$0xf] %vm62, %v61
    // Predicated region
    $region18: #{tpu_custom_call.1} parent=1 // pred_check
      _
    $region19: #{tpu_custom_call.1} parent=1 // pred_check_branch
      %65 = sbr.rel (0) target = $region21
    $region20: #{tpu_custom_call.1} parent=1 // pred_region
      %67 = vsyncadd [#allocation4], 0
      %s69 = sshll.u32 [#allocation3], 4
      %s70 = int_to_ptr.vmem [resolvable:$true] %s69
      %s71 = sshll.u32 %s4, 4
      %s72 = int_to_ptr.hbm [resolvable:$true] %s71
      %74 = dma.vmem_to_hbm [thread:$0]  %s70, 64, %s72, [#allocation4]
    $region21: #{tpu_custom_call.1} parent=1 // pred_fallthru
      _
    // Predicated region
    $region22: #{tpu_custom_call.1} parent=1 // pred_check
      _
    $region23: #{tpu_custom_call.1} parent=1 // pred_check_branch
      %76 = sbr.rel (0) target = $region25
    $region24: #{tpu_custom_call.1} parent=1 // pred_region
      %78 = dma.done [#allocation4], 64
    $region25: #{tpu_custom_call.1} parent=1 // pred_fallthru
      _
    %79 = vsyncpa [#allocation4], 1

</llo_original>
